<compile_context>
chip_gen: v5e
topology: v5e:2x2
jax: 0.10.0
libtpu: 0.0.40
codegen_flags: <defaults>
</compile_context>

<pallas_src>
import numpy as np
import jax
import jax.numpy as jnp
from jax import lax
from jax.experimental import pallas as pl
from jax.experimental.pallas import tpu as pltpu


# --------------------------------------------------------------------------- #
# Kernel factory: one grid step processes Bt batch elements.
#   x_ref       : (Bt, C, S)    backbone features, native channels-first (bf16 or f32)
#   wfull_ref   : (NOUT+1, C)   [Convmask.weight ; classifier.weight ; classifier_swap.weight], bf16
#   negmask_ref : (M, S)        additive window mask with the conv bias folded in:
#                               bias inside pooling window m, bias-1e30 outside
# output:
#   out_ref     : (Bt, OUT_PAD=128)  lane-dense slab [cls | swap | mask | zeros]
# --------------------------------------------------------------------------- #
def _make_head_kernel(Bt, S, NOUT, M, OUT_PAD):
    NW = NOUT + 1                      # fused weight rows: [conv ; cls ; swap]
    inv_s = 1.0 / float(S)

    def head_kernel(x_ref, wfull_ref, negmask_ref, out_ref):
        # Selector masks for the tiny sublane->lane reorientation of the per-batch results.
        # Hoisted out of the (unrolled) batch loop (JAX does not CSE broadcasts).
        sel_rid = lax.broadcasted_iota(jnp.int32, (NW, OUT_PAD), 0)
        sel_cid = lax.broadcasted_iota(jnp.int32, (NW, OUT_PAD), 1)
        cls_sel = sel_cid == (sel_rid - 1)        # row r (1..NOUT) -> lane r-1; conv row 0 excluded
        msk_rid = lax.broadcasted_iota(jnp.int32, (M, OUT_PAD), 0)
        msk_cid = lax.broadcasted_iota(jnp.int32, (M, OUT_PAD), 1)
        msk_sel = msk_cid == (msk_rid + NOUT)     # lanes [NOUT, NOUT + M)

        def body(b, carry):
            xb = x_ref[b]                                                      # (C, S)
            if xb.dtype != jnp.bfloat16:
                xb = xb.astype(jnp.bfloat16)       # cast in VMEM (no extra HBM pass)

            # Single fused MXU matmul: row 0 = conv pre-activation, rows 1.. = classifiers.
            g = jnp.dot(wfull_ref[...], xb,
                        preferred_element_type=jnp.float32)                    # (NW, S)

            # mean_S(x) @ W^T == sum_S(W @ x) / S  (linear ops commute); row 0 is unused here.
            col = jnp.sum(g, axis=-1, keepdims=True) * inv_s                   # (NW, 1)

            # MaxPool3d((1,5,5), stride=2) via additive window mask (bias folded in) + lane
            # max, then sigmoid (sigmoid is monotonic, so pool-then-sigmoid == PyTorch order).
            mpre = g[0:1, :]                                                   # (1, S)
            win = mpre + negmask_ref[...]                                      # (M, S)
            mask_col = jax.nn.sigmoid(jnp.max(win, axis=-1, keepdims=True))    # (M, 1)

            # Re-orient the tiny column results into one lane-dense (1, OUT_PAD) row:
            #   row[j] = col[j+1]          for j <  NOUT          (cls | swap)
            #   row[j] = mask_col[j-NOUT]  for NOUT <= j < NOUT+M, else 0.
            row = (jnp.sum(jnp.where(cls_sel, col, 0.0), axis=0, keepdims=True)
                   + jnp.sum(jnp.where(msk_sel, mask_col, 0.0), axis=0, keepdims=True))
            out_ref[pl.ds(b, 1), :] = row
            return carry

        # Fully unroll the short fixed batch loop (LLO scheduler visibility).
        lax.fori_loop(0, Bt, body, None, unroll=True)

    return head_kernel


def build_window_mask(T, H, W, kt=1, kh=5, kw=5, stride=2):
    """Additive mask (M, S): 0 where spatial index s is inside pooling window m, else -1e30."""
    Tp = (T - kt) // stride + 1
    Hp = (H - kh) // stride + 1
    Wp = (W - kw) // stride + 1
    S = T * H * W
    Mm = Tp * Hp * Wp
    neg = np.full((Mm, S), -1e30, dtype=np.float32)
    m = 0
    for tp in range(Tp):
        for hp in range(Hp):
            for wp in range(Wp):
                for dt in range(kt):
                    for dh in range(kh):
                        for dw in range(kw):
                            t = stride * tp + dt
                            h = stride * hp + dh
                            w = stride * wp + dw
                            neg[m, t * H * W + h * W + w] = 0.0
                m += 1
    return jnp.asarray(neg), Mm


def _pick_batch_tile(B, bytes_per_batch_elem):
    """Largest divisor of B that (a) keeps one x block <= ~8 MiB (v7x VMEM budget with
    double/triple buffering headroom), (b) is <= 8, and (c) when possible leaves nb >= 2
    so the 'parallel' batch axis can shard across v7x's two TensorCores."""
    cap = max(1, int((8 * 1024 * 1024) // max(1, bytes_per_batch_elem)))
    cap = min(cap, 8)
    divs = [d for d in range(1, B + 1) if B % d == 0 and d <= cap]
    bt = max(divs) if divs else 1
    if B > 1 and B // bt < 2:
        smaller = [d for d in divs if d < bt]
        if smaller:
            bt = max(smaller)
    return bt


def main_model_forward(x_feat, conv_w, conv_b, w_cls, w_swap, neg_mask):
    """x_feat: (B, C, T, H, W) NCDHW backbone features.  Weights in PyTorch orientation:
       conv_w (1, C), conv_b (1, 1), w_cls (numcls, C), w_swap (2, C)."""
    B, C, T, H, W = x_feat.shape
    S = T * H * W
    M = neg_mask.shape[0]
    NCLS = w_cls.shape[0]
    NSWAP = w_swap.shape[0]
    NOUT = NCLS + NSWAP
    NW = NOUT + 1
    OUT_PAD = 128
    assert NOUT + M <= OUT_PAD

    # Native channels-first layout: NCDHW -> (B, C, S) is a pure reshape (no transpose, no
    # extra HBM pass).  Features are streamed in their native dtype; any bf16 cast happens
    # in VMEM inside the kernel, so there is no standalone cast pass over the big tensor.
    x_cs = x_feat.reshape(B, C, S)

    # Fused weight: [Convmask ; classifier ; classifier_swap]  -> one MXU matmul per element.
    wfull = jnp.concatenate([conv_w, w_cls, w_swap], axis=0).astype(jnp.bfloat16)   # (NW, C)

    # Fold the conv bias into the additive pooling mask (max(x) + b == max(x + b)).
    negm = neg_mask.astype(jnp.float32) + conv_b.astype(jnp.float32).reshape(1, 1)  # (M, S)

    # Batch-block size: VMEM-bounded divisor of B (lane-padded S!), preferring >= 2 grid
    # steps so v7x's two TensorCores both get work.
    S_pad = ((S + 127) // 128) * 128
    bytes_per_batch_elem = C * S_pad * jnp.dtype(x_cs.dtype).itemsize
    Bt = _pick_batch_tile(B, bytes_per_batch_elem)
    nb = B // Bt

    kernel = _make_head_kernel(Bt, S, NOUT, M, OUT_PAD)

    x_spec_kwargs = {}
    if nb >= 3:
        # v5e: deeper input buffering keeps the (slower) HBM DMA engine continuously busy.
        x_spec_kwargs["pipeline_mode"] = pl.Buffered(3)

    grid_spec = pltpu.PrefetchScalarGridSpec(
        num_scalar_prefetch=0,
        grid=(nb,),
        in_specs=[
            pl.BlockSpec((Bt, C, S), lambda i: (i, 0, 0), **x_spec_kwargs),  # features
            pl.BlockSpec((NW, C), lambda i: (0, 0)),                         # fused weights
            pl.BlockSpec((M, S), lambda i: (0, 0)),                          # pool mask (+bias)
        ],
        # 3-D output with a squeezed leading block dim keeps (Bt, OUT_PAD) legal under the
        # (8,128) rule for any Bt (block dims equal the full array dims / 128-lane wide).
        out_specs=pl.BlockSpec((None, Bt, OUT_PAD), lambda i: (i, 0, 0)),
    )

    out = pl.pallas_call(
        kernel,
        out_shape=jax.ShapeDtypeStruct((nb, Bt, OUT_PAD), jnp.float32),
        grid_spec=grid_spec,
        compiler_params=pltpu.CompilerParams(dimension_semantics=("parallel",)),
    )(x_cs, wfull, negm)

    out = out.reshape(B, OUT_PAD)
    cls_out = out[:, :NCLS]
    swap_out = out[:, NCLS:NOUT]
    mask_out = out[:, NOUT:NOUT + M]
    return cls_out, swap_out, mask_out


def reference_forward(x_feat, conv_w, conv_b, w_cls, w_swap, kt=1, kh=5, kw=5, stride=2):
    """Pure-JAX replica of the PyTorch head, for correctness checking (f32)."""
    hi = lax.Precision.HIGHEST
    B, C, T, H, W = x_feat.shape
    m = jnp.einsum('bcthw,c->bthw', x_feat, conv_w[0], precision=hi) + conv_b[0, 0]
    Tp = (T - kt) // stride + 1
    Hp = (H - kh) // stride + 1
    Wp = (W - kw) // stride + 1
    cols = []
    for tp in range(Tp):
        for hp in range(Hp):
            for wp in range(Wp):
                win = m[:, stride * tp:stride * tp + kt,
                        stride * hp:stride * hp + kh,
                        stride * wp:stride * wp + kw]
                cols.append(jnp.max(win, axis=(1, 2, 3)))
    mask = jax.nn.sigmoid(jnp.stack(cols, axis=1))           # (B, M)
    feat = jnp.mean(x_feat, axis=(2, 3, 4))                  # (B, C)
    cls = jnp.dot(feat, w_cls.T, precision=hi)
    swap = jnp.dot(feat, w_swap.T, precision=hi)
    return cls, swap, mask


if __name__ == "__main__":
    # Config equivalent: use_dcl=True, cls_2=True, numcls=8, use_Asoftmax=False.
    B, C, T, H, W = 2, 1024, 4, 7, 7
    NUM_CLASSES = 8
    NUM_SWAP = 2

    key = jax.random.PRNGKey(0)
    kx, kcw, kcb, k1, k2 = jax.random.split(key, 5)

    # Backbone feature map stand-in (what self.model(x) would produce).
    x_feat = jax.random.normal(kx, (B, C, T, H, W), dtype=jnp.float32)

    # Deterministic parameter init (PyTorch weight orientations).
    conv_w = 0.02 * jax.random.normal(kcw, (1, C), dtype=jnp.float32)          # Conv3d(1024,1,1) weight
    conv_b = 0.1 * jax.random.normal(kcb, (1, 1), dtype=jnp.float32)           # Conv3d bias
    w_cls = 0.02 * jax.random.normal(k1, (NUM_CLASSES, C), dtype=jnp.float32)  # Linear(1024,numcls).weight
    w_swap = 0.02 * jax.random.normal(k2, (NUM_SWAP, C), dtype=jnp.float32)    # Linear(1024,2).weight

    # The kernel streams activations/weights in bf16 (f32 accumulation); round once here so
    # the pure-JAX f32 reference sees the identical (bf16-rounded) inputs.
    x_bf = x_feat.astype(jnp.bfloat16)
    conv_w_bf = conv_w.astype(jnp.bfloat16)
    w_cls_bf = w_cls.astype(jnp.bfloat16)
    w_swap_bf = w_swap.astype(jnp.bfloat16)

    neg_mask, M = build_window_mask(T, H, W)

    cls_out, swap_out, mask_out = main_model_forward(
        x_bf, conv_w_bf, conv_b, w_cls_bf, w_swap_bf, neg_mask)
    jax.block_until_ready((cls_out, swap_out, mask_out))

    # Numerical check against a pure-JAX reference of the PyTorch head.
    r_cls, r_swap, r_mask = reference_forward(
        x_bf.astype(jnp.float32), conv_w_bf.astype(jnp.float32), conv_b,
        w_cls_bf.astype(jnp.float32), w_swap_bf.astype(jnp.float32))

    np.testing.assert_allclose(np.asarray(cls_out), np.asarray(r_cls), rtol=2e-3, atol=2e-3)
    np.testing.assert_allclose(np.asarray(swap_out), np.asarray(r_swap), rtol=2e-3, atol=2e-3)
    np.testing.assert_allclose(np.asarray(mask_out), np.asarray(r_mask), rtol=2e-3, atol=2e-3)

    assert cls_out.shape == (B, NUM_CLASSES)
    assert swap_out.shape == (B, NUM_SWAP)
    assert mask_out.shape == (B, M)
    print("KERNEL_OK")
</pallas_src>

<mosaic_0001>
module attributes {stable_mosaic.version = 11 : i64} {
  func.func @head_kernel(%arg0: i32, %arg1: memref<1x1024x196xbf16, #tpu.memory_space<vmem>>, %arg2: memref<11x1024xbf16, #tpu.memory_space<vmem>>, %arg3: memref<8x196xf32, #tpu.memory_space<vmem>>, %arg4: memref<1x1x128xf32, #tpu.memory_space<vmem>>) attributes {dimension_semantics = [#tpu.dimension_semantics<parallel>], iteration_bounds = array<i64: 2>, scalar_prefetch = 0 : i64, scratch_operands = 0 : i64, tpu.core_type = #tpu.core_type<tc>, window_params = [{transform_indices = @transform_0, window_bounds = array<i64: 1, 1024, 196>}, {pipeline_mode = #tpu.pipeline_mode<synchronous>, transform_indices = @transform_1, window_bounds = array<i64: 11, 1024>}, {pipeline_mode = #tpu.pipeline_mode<synchronous>, transform_indices = @transform_2, window_bounds = array<i64: 8, 196>}, {transform_indices = @transform_3, window_bounds = array<i64: 1, 1, 128>}]} {
    %0 = tpu.iota {dimensions = array<i32: 0>} : vector<11x128xi32>
    %1 = tpu.iota {dimensions = array<i32: 1>} : vector<11x128xi32>
    %c1_i32 = arith.constant 1 : i32
    %2 = vector.broadcast %c1_i32 : i32 to vector<11x128xi32>
    %3 = arith.subi %0, %2 : vector<11x128xi32>
    %4 = arith.cmpi eq, %1, %3 : vector<11x128xi32>
    %5 = tpu.iota {dimensions = array<i32: 0>} : vector<8x128xi32>
    %6 = tpu.iota {dimensions = array<i32: 1>} : vector<8x128xi32>
    %c10_i32 = arith.constant 10 : i32
    %7 = vector.broadcast %c10_i32 : i32 to vector<8x128xi32>
    %8 = arith.addi %5, %7 : vector<8x128xi32>
    %9 = arith.cmpi eq, %6, %8 : vector<8x128xi32>
    %c0_i32 = arith.constant 0 : i32
    %10 = arith.index_cast %c0_i32 : i32 to index
    %c0 = arith.constant 0 : index
    %c0_0 = arith.constant 0 : index
    %11 = vector.load %arg1[%10, %c0, %c0_0] : memref<1x1024x196xbf16, #tpu.memory_space<vmem>>, vector<1x1024x196xbf16>
    %12 = vector.shape_cast %11 : vector<1x1024x196xbf16> to vector<1024x196xbf16>
    %c0_1 = arith.constant 0 : index
    %c0_2 = arith.constant 0 : index
    %13 = vector.load %arg2[%c0_1, %c0_2] : memref<11x1024xbf16, #tpu.memory_space<vmem>>, vector<11x1024xbf16>
    %cst = arith.constant dense<0.000000e+00> : vector<11x196xf32>
    %14 = tpu.matmul %13, %12, %cst {dimension_numbers = #tpu.dot_dimension_numbers<[1], [0], [0], [1], [0, 0, 1, 1], [], []>} : vector<11x1024xbf16>, vector<1024x196xbf16>, vector<11x196xf32> -> vector<11x196xf32>
    %cst_3 = arith.constant dense<0.000000e+00> : vector<11xf32>
    %15 = vector.multi_reduction <add>, %14, %cst_3 [1] : vector<11x196xf32> to vector<11xf32>
    %16 = vector.shape_cast %15 : vector<11xf32> to vector<11x1xf32>
    %cst_4 = arith.constant 0.00510204071 : f32
    %17 = vector.broadcast %cst_4 : f32 to vector<11x1xf32>
    %18 = arith.mulf %16, %17 : vector<11x1xf32>
    %19 = vector.extract_strided_slice %14 {offsets = [0, 0], sizes = [1, 196], strides = [1, 1]} : vector<11x196xf32> to vector<1x196xf32>
    %c0_5 = arith.constant 0 : index
    %c0_6 = arith.constant 0 : index
    %20 = vector.load %arg3[%c0_5, %c0_6] : memref<8x196xf32, #tpu.memory_space<vmem>>, vector<8x196xf32>
    %21 = vector.broadcast %19 : vector<1x196xf32> to vector<8x196xf32>
    %22 = arith.addf %21, %20 : vector<8x196xf32>
    %cst_7 = arith.constant dense<0xFF800000> : vector<8xf32>
    %23 = vector.multi_reduction <maximumf>, %22, %cst_7 [1] : vector<8x196xf32> to vector<8xf32>
    %24 = vector.shape_cast %23 : vector<8xf32> to vector<8x1xf32>
    %25 = arith.negf %24 : vector<8x1xf32>
    %26 = math.exp %25 : vector<8x1xf32>
    %cst_8 = arith.constant 1.000000e+00 : f32
    %27 = vector.broadcast %cst_8 : f32 to vector<8x1xf32>
    %28 = arith.addf %27, %26 : vector<8x1xf32>
    %29 = arith.divf %27, %28 : vector<8x1xf32>
    %cst_9 = arith.constant 0.000000e+00 : f32
    %30 = vector.shape_cast %18 : vector<11x1xf32> to vector<11x1xf32>
    %31 = vector.broadcast %30 : vector<11x1xf32> to vector<11x128xf32>
    %32 = vector.broadcast %cst_9 : f32 to vector<11x128xf32>
    %33 = arith.select %4, %31, %32 : vector<11x128xi1>, vector<11x128xf32>
    %cst_10 = arith.constant dense<0.000000e+00> : vector<128xf32>
    %34 = vector.multi_reduction <add>, %33, %cst_10 [0] : vector<11x128xf32> to vector<128xf32>
    %35 = vector.shape_cast %34 : vector<128xf32> to vector<1x128xf32>
    %cst_11 = arith.constant 0.000000e+00 : f32
    %36 = vector.shape_cast %29 : vector<8x1xf32> to vector<8x1xf32>
    %37 = vector.broadcast %36 : vector<8x1xf32> to vector<8x128xf32>
    %38 = vector.broadcast %cst_11 : f32 to vector<8x128xf32>
    %39 = arith.select %9, %37, %38 : vector<8x128xi1>, vector<8x128xf32>
    %cst_12 = arith.constant dense<0.000000e+00> : vector<128xf32>
    %40 = vector.multi_reduction <add>, %39, %cst_12 [0] : vector<8x128xf32> to vector<128xf32>
    %41 = vector.shape_cast %40 : vector<128xf32> to vector<1x128xf32>
    %42 = arith.addf %35, %41 : vector<1x128xf32>
    %c0_13 = arith.constant 0 : index
    %43 = arith.index_cast %c0_i32 : i32 to index
    %c0_14 = arith.constant 0 : index
    %44 = vector.load %arg4[%c0_13, %43, %c0_14] : memref<1x1x128xf32, #tpu.memory_space<vmem>>, vector<1x1x128xf32>
    %45 = vector.shape_cast %44 : vector<1x1x128xf32> to vector<1x128xf32>
    %46 = vector.shape_cast %42 : vector<1x128xf32> to vector<1x1x128xf32>
    tpu.vector_store %arg4[%c0_13, %43, %c0_14], %46 {strides = array<i32>} : memref<1x1x128xf32, #tpu.memory_space<vmem>>, vector<1x1x128xf32>,
    %c1_i32_15 = arith.constant 1 : i32
    return
  }
  func.func @transform_0(%arg0: i32) -> (i32, i32, i32) {
    %c0_i32 = arith.constant 0 : i32
    %c0_i32_0 = arith.constant 0 : i32
    %c0_i32_1 = arith.constant 0 : i32
    return %arg0, %c0_i32, %c0_i32_0 : i32, i32, i32
  }
  func.func @transform_1(%arg0: i32) -> (i32, i32) {
    %c0_i32 = arith.constant 0 : i32
    %c0_i32_0 = arith.constant 0 : i32
    %c0_i32_1 = arith.constant 0 : i32
    return %c0_i32, %c0_i32_0 : i32, i32
  }
  func.func @transform_2(%arg0: i32) -> (i32, i32) {
    %c0_i32 = arith.constant 0 : i32
    %c0_i32_0 = arith.constant 0 : i32
    %c0_i32_1 = arith.constant 0 : i32
    return %c0_i32, %c0_i32_0 : i32, i32
  }
  func.func @transform_3(%arg0: i32) -> (i32, i32, i32) {
    %c0_i32 = arith.constant 0 : i32
    %c0_i32_0 = arith.constant 0 : i32
    %c0_i32_1 = arith.constant 0 : i32
    return %arg0, %c0_i32, %c0_i32_0 : i32, i32, i32
  }
}

</mosaic_0001>

<llo_original>
// kernel: tpu_custom_call.1
$region0: #{tpu_custom_call.1}
  #allocation0 [shape = 'u32[]', space=smem, size = 0x4, offset = 0x4, fixed_abs, tag = 'smem constant byte address 0x4 - core index']
  #allocation1 [shape = 'u32[72,128]{1,0:T(1,128)}', space=vmem, size = 0x9000, scoped, tag = 'internal scratch']
  %s0 = inlined_call_operand.vmem [shape: bf16[2,1024,196], index: 0, kind: input, shape index: {}]
  %s1 = inlined_call_operand.vmem [shape: bf16[11,1024], index: 1, kind: input, shape index: {}]
  %s2 = inlined_call_operand.vmem [shape: f32[8,196], index: 2, kind: input, shape index: {}]
  %s3 = inlined_call_operand.hbm [shape: f32[2,1,128], index: 3, kind: output, shape index: {}]
  %s4 = sld [smem:[#allocation0]]
  $region45: #{tpu_custom_call.1} parent=0
    _
  %s6 = ssub.s32 1, %s4
  %s7 = scalar_select 0, %s6, %s4
  $region1: #{tpu_custom_call.1} parent=0
    #allocation2 [shape = 'u8[1024]{0}', space=vmem, size = 0x400, scoped, tag = 'output window, operand 0']
    #allocation3 [shape = 's32[2]{0}', space=sflag, size = 0x8, scoped, tag = 'scoped memory for tpu_custom_call.1']
    %8 = vsyncpa [#allocation3], 0
    %s9 = scalar_lea.sflag [#allocation3], 1
    %10 = vsyncpa %s9, 0
    loop: start=0, step=1, limit=4
    $region2: #{tpu_custom_call.1} parent=1 // loop_pre_header
      _
    $region3: #{tpu_custom_call.1} parent=1 // loop_header
      %s12 = sphi 0, %s16
      %p13 = scmp.ge.s32.totalorder %s12, 4
      %s22 = sphi 0, %s24
      %s25 = sphi 0, %s22
      %s26 = sphi 0, %s25
      %s42 = sphi 0, %s26
      %s46 = sphi 0, %s46
      %s48 = sphi 0, %s46
      %s49 = sphi 0, %s48
      %s63 = sphi 0, %s49
      %s67 = sphi 0, %s67
      %s69 = sphi 0, %s67
      %s70 = sphi 0, %s69
      %s84 = sphi 0, %s70
      %s90 = sphi 0, %s92
      %s93 = sphi 0, %s90
      %s94 = sphi 0, %s93
      %s110 = sphi 0, %s94
    $region4: #{tpu_custom_call.1} parent=1 // loop_header_branch
      %15 = sbr.rel (%p13) target = $region8
    $region5: #{tpu_custom_call.1} parent=1 // loop_body
      %s17 = ssub.s32 %s12, 1
      %s18 = ssub.s32 %s12, 2
      %s19 = sadd.s32 %s12, 1
      %s20 = ssub.s32 %s12, %s19
      %p21 = scmp.eq.s32.totalorder %s20, 0
      %s23 = sadd.s32 %s22, 1
      %s24 = scalar_select %p21, %s22, %s23
      %p27 = pneg %p21
      %p28 = scmp.eq.s32.totalorder %s12, 1
      %p29 = por %p27, %p28
      %p30 = scmp.ne.s32.totalorder %s22, %s25
      %p31 = scmp.eq.s32.totalorder %s12, 0
      %p32 = por %p30, %p31
      %p33 = scmp.ne.s32.totalorder %s22, %s25
      %p34 = scmp.eq.s32.totalorder %s17, 1
      %p35 = por %p33, %p34
      %p36 = scmp.ne.s32.totalorder %s25, %s26
      %p37 = scmp.eq.s32.totalorder %s17, 0
      %p38 = por %p36, %p37
      %p39 = scmp.ne.s32.totalorder %s25, %s26
      %p40 = scmp.eq.s32.totalorder %s18, 1
      %p41 = por %p39, %p40
      %p43 = scmp.ne.s32.totalorder %s26, %s42
      %p44 = scmp.eq.s32.totalorder %s18, 0
      %p45 = por %p43, %p44
      %s47 = sadd.s32 %s46, 1
      %p50 = scmp.eq.s32.totalorder %s12, 1
      %p51 = scmp.ne.s32.totalorder %s46, %s48
      %p52 = scmp.eq.s32.totalorder %s12, 0
      %p53 = por %p51, %p52
      %p54 = scmp.ne.s32.totalorder %s46, %s48
      %p55 = scmp.eq.s32.totalorder %s17, 1
      %p56 = por %p54, %p55
      %p57 = scmp.ne.s32.totalorder %s48, %s49
      %p58 = scmp.eq.s32.totalorder %s17, 0
      %p59 = por %p57, %p58
      %p60 = scmp.ne.s32.totalorder %s48, %s49
      %p61 = scmp.eq.s32.totalorder %s18, 1
      %p62 = por %p60, %p61
      %p64 = scmp.ne.s32.totalorder %s49, %s63
      %p65 = scmp.eq.s32.totalorder %s18, 0
      %p66 = por %p64, %p65
      %s68 = sadd.s32 %s67, 1
      %p71 = scmp.eq.s32.totalorder %s12, 1
      %p72 = scmp.ne.s32.totalorder %s67, %s69
      %p73 = scmp.eq.s32.totalorder %s12, 0
      %p74 = por %p72, %p73
      %p75 = scmp.ne.s32.totalorder %s67, %s69
      %p76 = scmp.eq.s32.totalorder %s17, 1
      %p77 = por %p75, %p76
      %p78 = scmp.ne.s32.totalorder %s69, %s70
      %p79 = scmp.eq.s32.totalorder %s17, 0
      %p80 = por %p78, %p79
      %p81 = scmp.ne.s32.totalorder %s69, %s70
      %p82 = scmp.eq.s32.totalorder %s18, 1
      %p83 = por %p81, %p82
      %p85 = scmp.ne.s32.totalorder %s70, %s84
      %p86 = scmp.eq.s32.totalorder %s18, 0
      %p87 = por %p85, %p86
      %s88 = ssub.s32 %s12, %s19
      %p89 = scmp.eq.s32.totalorder %s88, 0
      %s91 = sadd.s32 %s90, 1
      %s92 = scalar_select %p89, %s90, %s91
      %p95 = pneg %p89
      %p96 = scmp.eq.s32.totalorder %s12, 1
      %p97 = por %p95, %p96
      %p98 = scmp.ne.s32.totalorder %s90, %s93
      %p99 = scmp.eq.s32.totalorder %s12, 0
      %p100 = por %p98, %p99
      %p101 = scmp.ne.s32.totalorder %s90, %s93
      %p102 = scmp.eq.s32.totalorder %s17, 1
      %p103 = por %p101, %p102
      %p104 = scmp.ne.s32.totalorder %s93, %s94
      %p105 = scmp.eq.s32.totalorder %s17, 0
      %p106 = por %p104, %p105
      %p107 = scmp.ne.s32.totalorder %s93, %s94
      %p108 = scmp.eq.s32.totalorder %s18, 1
      %p109 = por %p107, %p108
      %p111 = scmp.ne.s32.totalorder %s94, %s110
      %p112 = scmp.eq.s32.totalorder %s18, 0
      %p113 = por %p111, %p112
      %p114 = scmp.le.s32.totalorder 1, %s12
      %p115 = scmp.lt.s32.totalorder %s12, 3
      %p116 = pnand %p114, %p115
      %p117 = pneg %p116
      // Predicated region
      $region9: #{tpu_custom_call.1} parent=5 // pred_check
        _
      $region10: #{tpu_custom_call.1} parent=5 // pred_check_branch
        %119 = sbr.rel (%p116) target = $region12
      $region11: #{tpu_custom_call.1} parent=5 // pred_region
        %s120 = ssub.s32 %s12, 1
        // Predicated region
        $region13: #{tpu_custom_call.1} parent=11 // pred_check
          %p121 = pneg %p59
        $region14: #{tpu_custom_call.1} parent=11 // pred_check_branch
          %123 = sbr.rel (%p121) target = $region16
        $region15: #{tpu_custom_call.1} parent=11 // pred_region
          _
        $region16: #{tpu_custom_call.1} parent=11 // pred_fallthru
          _
        // Predicated region
        $region17: #{tpu_custom_call.1} parent=11 // pred_check
          %p124 = pneg %p80
        $region18: #{tpu_custom_call.1} parent=11 // pred_check_branch
          %126 = sbr.rel (%p124) target = $region20
        $region19: #{tpu_custom_call.1} parent=11 // pred_region
          _
        $region20: #{tpu_custom_call.1} parent=11 // pred_fallthru
          _
      $region12: #{tpu_custom_call.1} parent=5 // pred_fallthru
        _
      %p127 = scmp.lt.s32.totalorder %s12, 2
      // Predicated region
      $region21: #{tpu_custom_call.1} parent=5 // pred_check
        %p128 = pneg %p127
      $region22: #{tpu_custom_call.1} parent=5 // pred_check_branch
        %130 = sbr.rel (%p128) target = $region24
      $region23: #{tpu_custom_call.1} parent=5 // pred_region
        // Predicated region
        $region25: #{tpu_custom_call.1} parent=23 // pred_check
          %p131 = pneg %p32
        $region26: #{tpu_custom_call.1} parent=23 // pred_check_branch
          %133 = sbr.rel (%p131) target = $region28
        $region27: #{tpu_custom_call.1} parent=23 // pred_region
          %p134 = scmp.lt.s32.totalorder %s12, 1
          %s135 = scalar_select %p134, %s12, 1
          %s136 = smul.addr %s135, 256
          %s137 = smul.addr %s136, 4
          %s138 = scalar_lea.vmem %s0, %s137
        $region28: #{tpu_custom_call.1} parent=23 // pred_fallthru
          _
      $region24: #{tpu_custom_call.1} parent=5 // pred_fallthru
        _
      %p139 = scmp.le.s32.totalorder 1, %s12
      %p140 = scmp.lt.s32.totalorder %s12, 3
      %p141 = pnand %p139, %p140
      %p142 = pneg %p141
      // Predicated region
      $region29: #{tpu_custom_call.1} parent=5 // pred_check
        _
      $region30: #{tpu_custom_call.1} parent=5 // pred_check_branch
        %144 = sbr.rel (%p141) target = $region32
      $region31: #{tpu_custom_call.1} parent=5 // pred_region
        %s145 = ssub.s32 %s12, 1
        %p146 = scmp.lt.s32.totalorder %s17, 1
        %s147 = scalar_select %p146, %s17, 1
        %s148 = smul.addr %s147, 256
        %s149 = smul.addr %s148, 4
        %s150 = scalar_lea.vmem %s0, %s149
        %p151 = pneg %p38
        %p152 = pneg %p35
        %p153 = pneg %p59
        %p154 = pneg %p56
        %p155 = pneg %p80
        %p156 = pneg %p77
        %p157 = pneg %p106
        %p158 = pneg %p103
        %s159 = sand.u32 %s93, 1
        %s160 = scalar_lea.sflag [#allocation3], %s159
        %s161 = sand.u32 %s93, 1
        %s162 = scalar_lea.vmem [#allocation2], %s161
        %p163 = scmp.lt.s32.totalorder %s17, 1
        %s164 = scalar_select %p163, %s17, 1
        %s165 = smul.addr %s164, 256
        %s166 = smul.addr %s165, 4
        %s167 = scalar_lea.vmem %s0, %s166
        %v168 = vlaneseq
        %v169 = vshrl.u32 %v168, 7
        %v170 = vadd.s32 %v169, 8
        %v171 = vlaneseq
        %v172 = vand.u32 %v171, 127
        %v173 = vsub.s32 %v169, 1
        %v174 = vsub.s32 %v170, 1
        %vm175 = vcmp.eq.s32.totalorder %v172, %v173
        %vm176 = vcmp.eq.s32.totalorder %v172, %v174
        %v177 = vadd.s32 %v169, 10
        %vm178 = vcmp.eq.s32.totalorder %v172, %v177
        %v179 = vld [vmem:[%s167] sm:$0xff]
        %v180 = vld [vmem:[%s167 + $0x8] sm:$0xff]
        %v181 = vld [vmem:[%s167 + $0x10] sm:$0xff]
        %v182 = vld [vmem:[%s167 + $0x18] sm:$0xff]
        %v183 = vld [vmem:[%s167 + $0x20] sm:$0xff]
        %v184 = vld [vmem:[%s167 + $0x28] sm:$0xff]
        %v185 = vld [vmem:[%s167 + $0x30] sm:$0xff]
        %v186 = vld [vmem:[%s167 + $0x38] sm:$0xff]
        %v187 = vld [vmem:[%s167 + $0x40] sm:$0xff]
        %v188 = vld [vmem:[%s167 + $0x48] sm:$0xff]
        %v189 = vld [vmem:[%s167 + $0x50] sm:$0xff]
        %v190 = vld [vmem:[%s167 + $0x58] sm:$0xff]
        %v191 = vld [vmem:[%s167 + $0x60] sm:$0xff]
        %v192 = vld [vmem:[%s167 + $0x68] sm:$0xff]
        %v193 = vld [vmem:[%s167 + $0x70] sm:$0xff]
        %v194 = vld [vmem:[%s167 + $0x78] sm:$0xff]
        %v195 = vld [vmem:[%s167 + $0x80] sm:$0xff]
        %v196 = vld [vmem:[%s167 + $0x88] sm:$0xff]
        %v197 = vld [vmem:[%s167 + $0x90] sm:$0xff]
        %v198 = vld [vmem:[%s167 + $0x98] sm:$0xff]
        %v199 = vld [vmem:[%s167 + $0xa0] sm:$0xff]
        %v200 = vld [vmem:[%s167 + $0xa8] sm:$0xff]
        %v201 = vld [vmem:[%s167 + $0xb0] sm:$0xff]
        %v202 = vld [vmem:[%s167 + $0xb8] sm:$0xff]
        %v203 = vld [vmem:[%s167 + $0xc0] sm:$0xff]
        %v204 = vld [vmem:[%s167 + $0xc8] sm:$0xff]
        %v205 = vld [vmem:[%s167 + $0xd0] sm:$0xff]
        %v206 = vld [vmem:[%s167 + $0xd8] sm:$0xff]
        %v207 = vld [vmem:[%s167 + $0xe0] sm:$0xff]
        %v208 = vld [vmem:[%s167 + $0xe8] sm:$0xff]
        %v209 = vld [vmem:[%s167 + $0xf0] sm:$0xff]
        %v210 = vld [vmem:[%s167 + $0xf8] sm:$0xff]
        %v211 = vld [vmem:[%s167 + $0x100] sm:$0xff]
        %v212 = vld [vmem:[%s167 + $0x108] sm:$0xff]
        %v213 = vld [vmem:[%s167 + $0x110] sm:$0xff]
        %v214 = vld [vmem:[%s167 + $0x118] sm:$0xff]
        %v215 = vld [vmem:[%s167 + $0x120] sm:$0xff]
        %v216 = vld [vmem:[%s167 + $0x128] sm:$0xff]
        %v217 = vld [vmem:[%s167 + $0x130] sm:$0xff]
        %v218 = vld [vmem:[%s167 + $0x138] sm:$0xff]
        %v219 = vld [vmem:[%s167 + $0x140] sm:$0xff]
        %v220 = vld [vmem:[%s167 + $0x148] sm:$0xff]
        %v221 = vld [vmem:[%s167 + $0x150] sm:$0xff]
        %v222 = vld [vmem:[%s167 + $0x158] sm:$0xff]
        %v223 = vld [vmem:[%s167 + $0x160] sm:$0xff]
        %v224 = vld [vmem:[%s167 + $0x168] sm:$0xff]
        %v225 = vld [vmem:[%s167 + $0x170] sm:$0xff]
        %v226 = vld [vmem:[%s167 + $0x178] sm:$0xff]
        %v227 = vld [vmem:[%s167 + $0x180] sm:$0xff]
        %v228 = vld [vmem:[%s167 + $0x188] sm:$0xff]
        %v229 = vld [vmem:[%s167 + $0x190] sm:$0xff]
        %v230 = vld [vmem:[%s167 + $0x198] sm:$0xff]
        %v231 = vld [vmem:[%s167 + $0x1a0] sm:$0xff]
        %v232 = vld [vmem:[%s167 + $0x1a8] sm:$0xff]
        %v233 = vld [vmem:[%s167 + $0x1b0] sm:$0xff]
        %v234 = vld [vmem:[%s167 + $0x1b8] sm:$0xff]
        %v235 = vld [vmem:[%s167 + $0x1c0] sm:$0xff]
        %v236 = vld [vmem:[%s167 + $0x1c8] sm:$0xff]
        %v237 = vld [vmem:[%s167 + $0x1d0] sm:$0xff]
        %v238 = vld [vmem:[%s167 + $0x1d8] sm:$0xff]
        %v239 = vld [vmem:[%s167 + $0x1e0] sm:$0xff]
        %v240 = vld [vmem:[%s167 + $0x1e8] sm:$0xff]
        %v241 = vld [vmem:[%s167 + $0x1f0] sm:$0xff]
        %v242 = vld [vmem:[%s167 + $0x1f8] sm:$0xff]
        %v243 = vld [vmem:[%s167 + $0x200] sm:$0xff]
        %v244 = vld [vmem:[%s167 + $0x208] sm:$0xff]
        %v245 = vld [vmem:[%s167 + $0x210] sm:$0xff]
        %v246 = vld [vmem:[%s167 + $0x218] sm:$0xff]
        %v247 = vld [vmem:[%s167 + $0x220] sm:$0xff]
        %v248 = vld [vmem:[%s167 + $0x228] sm:$0xff]
        %v249 = vld [vmem:[%s167 + $0x230] sm:$0xff]
        %v250 = vld [vmem:[%s167 + $0x238] sm:$0xff]
        %v251 = vld [vmem:[%s167 + $0x240] sm:$0xff]
        %v252 = vld [vmem:[%s167 + $0x248] sm:$0xff]
        %v253 = vld [vmem:[%s167 + $0x250] sm:$0xff]
        %v254 = vld [vmem:[%s167 + $0x258] sm:$0xff]
        %v255 = vld [vmem:[%s167 + $0x260] sm:$0xff]
        %v256 = vld [vmem:[%s167 + $0x268] sm:$0xff]
        %v257 = vld [vmem:[%s167 + $0x270] sm:$0xff]
        %v258 = vld [vmem:[%s167 + $0x278] sm:$0xff]
        %v259 = vld [vmem:[%s167 + $0x280] sm:$0xff]
        %v260 = vld [vmem:[%s167 + $0x288] sm:$0xff]
        %v261 = vld [vmem:[%s167 + $0x290] sm:$0xff]
        %v262 = vld [vmem:[%s167 + $0x298] sm:$0xff]
        %v263 = vld [vmem:[%s167 + $0x2a0] sm:$0xff]
        %v264 = vld [vmem:[%s167 + $0x2a8] sm:$0xff]
        %v265 = vld [vmem:[%s167 + $0x2b0] sm:$0xff]
        %v266 = vld [vmem:[%s167 + $0x2b8] sm:$0xff]
        %v267 = vld [vmem:[%s167 + $0x2c0] sm:$0xff]
        %v268 = vld [vmem:[%s167 + $0x2c8] sm:$0xff]
        %v269 = vld [vmem:[%s167 + $0x2d0] sm:$0xff]
        %v270 = vld [vmem:[%s167 + $0x2d8] sm:$0xff]
        %v271 = vld [vmem:[%s167 + $0x2e0] sm:$0xff]
        %v272 = vld [vmem:[%s167 + $0x2e8] sm:$0xff]
        %v273 = vld [vmem:[%s167 + $0x2f0] sm:$0xff]
        %v274 = vld [vmem:[%s167 + $0x2f8] sm:$0xff]
        %v275 = vld [vmem:[%s167 + $0x300] sm:$0xff]
        %v276 = vld [vmem:[%s167 + $0x308] sm:$0xff]
        %v277 = vld [vmem:[%s167 + $0x310] sm:$0xff]
        %v278 = vld [vmem:[%s167 + $0x318] sm:$0xff]
        %v279 = vld [vmem:[%s167 + $0x320] sm:$0xff]
        %v280 = vld [vmem:[%s167 + $0x328] sm:$0xff]
        %v281 = vld [vmem:[%s167 + $0x330] sm:$0xff]
        %v282 = vld [vmem:[%s167 + $0x338] sm:$0xff]
        %v283 = vld [vmem:[%s167 + $0x340] sm:$0xff]
        %v284 = vld [vmem:[%s167 + $0x348] sm:$0xff]
        %v285 = vld [vmem:[%s167 + $0x350] sm:$0xff]
        %v286 = vld [vmem:[%s167 + $0x358] sm:$0xff]
        %v287 = vld [vmem:[%s167 + $0x360] sm:$0xff]
        %v288 = vld [vmem:[%s167 + $0x368] sm:$0xff]
        %v289 = vld [vmem:[%s167 + $0x370] sm:$0xff]
        %v290 = vld [vmem:[%s167 + $0x378] sm:$0xff]
        %v291 = vld [vmem:[%s167 + $0x380] sm:$0xff]
        %v292 = vld [vmem:[%s167 + $0x388] sm:$0xff]
        %v293 = vld [vmem:[%s167 + $0x390] sm:$0xff]
        %v294 = vld [vmem:[%s167 + $0x398] sm:$0xff]
        %v295 = vld [vmem:[%s167 + $0x3a0] sm:$0xff]
        %v296 = vld [vmem:[%s167 + $0x3a8] sm:$0xff]
        %v297 = vld [vmem:[%s167 + $0x3b0] sm:$0xff]
        %v298 = vld [vmem:[%s167 + $0x3b8] sm:$0xff]
        %v299 = vld [vmem:[%s167 + $0x3c0] sm:$0xff]
        %v300 = vld [vmem:[%s167 + $0x3c8] sm:$0xff]
        %v301 = vld [vmem:[%s167 + $0x3d0] sm:$0xff]
        %v302 = vld [vmem:[%s167 + $0x3d8] sm:$0xff]
        %v303 = vld [vmem:[%s167 + $0x3e0] sm:$0xff]
        %v304 = vld [vmem:[%s167 + $0x3e8] sm:$0xff]
        %v305 = vld [vmem:[%s167 + $0x3f0] sm:$0xff]
        %v306 = vld [vmem:[%s167 + $0x3f8] sm:$0xff]
        %v307 = vld [vmem:[%s1] sm:$0xff]
        %v308 = vld [vmem:[%s1 + $0x8] sm:$0xff]
        %v309 = vld [vmem:[%s1 + $0x10] sm:$0xff]
        %v310 = vld [vmem:[%s1 + $0x18] sm:$0xff]
        %v311 = vld [vmem:[%s1 + $0x20] sm:$0x33]
        %v312 = vld [vmem:[%s1 + $0x28] sm:$0x33]
        %v313 = vld [vmem:[%s1 + $0x30] sm:$0x33]
        %v314 = vld [vmem:[%s1 + $0x38] sm:$0x33]
        %v323 = vunpack.c.l.b16 %v307
        %v324 = vunpack.c.h.b16 %v307
        %v325 = vunpack.c.l.b16 %v308
        %v326 = vunpack.c.h.b16 %v308
        %v327 = vunpack.c.l.b16 %v309
        %v328 = vunpack.c.h.b16 %v309
        %v329 = vunpack.c.l.b16 %v310
        %v330 = vunpack.c.h.b16 %v310
        %v331 = vunpack.c.l.b16 %v311
        %v332 = vunpack.c.h.b16 %v311
        %v333 = vunpack.c.l.b16 %v312
        %v334 = vunpack.c.h.b16 %v312
        %v335 = vunpack.c.l.b16 %v313
        %v336 = vunpack.c.h.b16 %v313
        %v337 = vunpack.c.l.b16 %v314
        %v338 = vunpack.c.h.b16 %v314
        %v339 = vpack.c.b16 %v331, %v323
        %v340 = vpack.c.b16 %v332, %v324
        %v341 = vpack.c.b16 %v333, %v325
        %v342 = vpack.c.b16 %v334, %v326
        %v343 = vpack.c.b16 %v335, %v327
        %v344 = vpack.c.b16 %v336, %v328
        %v345 = vpack.c.b16 %v337, %v329
        %v346 = vpack.c.b16 %v338, %v330
        %v483 = vunpack.c.l.b16 %v179
        %v484 = vunpack.c.h.b16 %v179
        %v485 = vunpack.c.l.b16 %v180
        %v486 = vunpack.c.h.b16 %v180
        %v487 = vunpack.c.l.b16 %v181
        %v488 = vunpack.c.h.b16 %v181
        %v489 = vunpack.c.l.b16 %v182
        %v490 = vunpack.c.h.b16 %v182
        %v491 = vunpack.c.l.b16 %v183
        %v492 = vunpack.c.h.b16 %v183
        %v493 = vunpack.c.l.b16 %v184
        %v494 = vunpack.c.h.b16 %v184
        %v495 = vunpack.c.l.b16 %v185
        %v496 = vunpack.c.h.b16 %v185
        %v497 = vunpack.c.l.b16 %v186
        %v498 = vunpack.c.h.b16 %v186
        %v499 = vunpack.c.l.b16 %v187
        %v500 = vunpack.c.h.b16 %v187
        %v501 = vunpack.c.l.b16 %v188
        %v502 = vunpack.c.h.b16 %v188
        %v503 = vunpack.c.l.b16 %v189
        %v504 = vunpack.c.h.b16 %v189
        %v505 = vunpack.c.l.b16 %v190
        %v506 = vunpack.c.h.b16 %v190
        %v507 = vunpack.c.l.b16 %v191
        %v508 = vunpack.c.h.b16 %v191
        %v509 = vunpack.c.l.b16 %v192
        %v510 = vunpack.c.h.b16 %v192
        %v511 = vunpack.c.l.b16 %v193
        %v512 = vunpack.c.h.b16 %v193
        %v513 = vunpack.c.l.b16 %v194
        %v514 = vunpack.c.h.b16 %v194
        %v515 = vunpack.c.l.b16 %v195
        %v516 = vunpack.c.h.b16 %v195
        %v517 = vunpack.c.l.b16 %v196
        %v518 = vunpack.c.h.b16 %v196
        %v519 = vunpack.c.l.b16 %v197
        %v520 = vunpack.c.h.b16 %v197
        %v521 = vunpack.c.l.b16 %v198
        %v522 = vunpack.c.h.b16 %v198
        %v523 = vunpack.c.l.b16 %v199
        %v524 = vunpack.c.h.b16 %v199
        %v525 = vunpack.c.l.b16 %v200
        %v526 = vunpack.c.h.b16 %v200
        %v527 = vunpack.c.l.b16 %v201
        %v528 = vunpack.c.h.b16 %v201
        %v529 = vunpack.c.l.b16 %v202
        %v530 = vunpack.c.h.b16 %v202
        %v531 = vunpack.c.l.b16 %v203
        %v532 = vunpack.c.h.b16 %v203
        %v533 = vunpack.c.l.b16 %v204
        %v534 = vunpack.c.h.b16 %v204
        %v535 = vunpack.c.l.b16 %v205
        %v536 = vunpack.c.h.b16 %v205
        %v537 = vunpack.c.l.b16 %v206
        %v538 = vunpack.c.h.b16 %v206
        %v539 = vunpack.c.l.b16 %v207
        %v540 = vunpack.c.h.b16 %v207
        %v541 = vunpack.c.l.b16 %v208
        %v542 = vunpack.c.h.b16 %v208
        %v543 = vunpack.c.l.b16 %v209
        %v544 = vunpack.c.h.b16 %v209
        %v545 = vunpack.c.l.b16 %v210
        %v546 = vunpack.c.h.b16 %v210
        %v547 = vunpack.c.l.b16 %v211
        %v548 = vunpack.c.h.b16 %v211
        %v549 = vunpack.c.l.b16 %v212
        %v550 = vunpack.c.h.b16 %v212
        %v551 = vunpack.c.l.b16 %v213
        %v552 = vunpack.c.h.b16 %v213
        %v553 = vunpack.c.l.b16 %v214
        %v554 = vunpack.c.h.b16 %v214
        %v555 = vunpack.c.l.b16 %v215
        %v556 = vunpack.c.h.b16 %v215
        %v557 = vunpack.c.l.b16 %v216
        %v558 = vunpack.c.h.b16 %v216
        %v559 = vunpack.c.l.b16 %v217
        %v560 = vunpack.c.h.b16 %v217
        %v561 = vunpack.c.l.b16 %v218
        %v562 = vunpack.c.h.b16 %v218
        %v563 = vunpack.c.l.b16 %v219
        %v564 = vunpack.c.h.b16 %v219
        %v565 = vunpack.c.l.b16 %v220
        %v566 = vunpack.c.h.b16 %v220
        %v567 = vunpack.c.l.b16 %v221
        %v568 = vunpack.c.h.b16 %v221
        %v569 = vunpack.c.l.b16 %v222
        %v570 = vunpack.c.h.b16 %v222
        %v571 = vunpack.c.l.b16 %v223
        %v572 = vunpack.c.h.b16 %v223
        %v573 = vunpack.c.l.b16 %v224
        %v574 = vunpack.c.h.b16 %v224
        %v575 = vunpack.c.l.b16 %v225
        %v576 = vunpack.c.h.b16 %v225
        %v577 = vunpack.c.l.b16 %v226
        %v578 = vunpack.c.h.b16 %v226
        %v579 = vunpack.c.l.b16 %v227
        %v580 = vunpack.c.h.b16 %v227
        %v581 = vunpack.c.l.b16 %v228
        %v582 = vunpack.c.h.b16 %v228
        %v583 = vunpack.c.l.b16 %v229
        %v584 = vunpack.c.h.b16 %v229
        %v585 = vunpack.c.l.b16 %v230
        %v586 = vunpack.c.h.b16 %v230
        %v587 = vunpack.c.l.b16 %v231
        %v588 = vunpack.c.h.b16 %v231
        %v589 = vunpack.c.l.b16 %v232
        %v590 = vunpack.c.h.b16 %v232
        %v591 = vunpack.c.l.b16 %v233
        %v592 = vunpack.c.h.b16 %v233
        %v593 = vunpack.c.l.b16 %v234
        %v594 = vunpack.c.h.b16 %v234
        %v595 = vunpack.c.l.b16 %v235
        %v596 = vunpack.c.h.b16 %v235
        %v597 = vunpack.c.l.b16 %v236
        %v598 = vunpack.c.h.b16 %v236
        %v599 = vunpack.c.l.b16 %v237
        %v600 = vunpack.c.h.b16 %v237
        %v601 = vunpack.c.l.b16 %v238
        %v602 = vunpack.c.h.b16 %v238
        %v603 = vunpack.c.l.b16 %v239
        %v604 = vunpack.c.h.b16 %v239
        %v605 = vunpack.c.l.b16 %v240
        %v606 = vunpack.c.h.b16 %v240
        %v607 = vunpack.c.l.b16 %v241
        %v608 = vunpack.c.h.b16 %v241
        %v609 = vunpack.c.l.b16 %v242
        %v610 = vunpack.c.h.b16 %v242
        %v611 = vunpack.c.l.b16 %v243
        %v612 = vunpack.c.h.b16 %v243
        %v613 = vunpack.c.l.b16 %v244
        %v614 = vunpack.c.h.b16 %v244
        %v615 = vunpack.c.l.b16 %v245
        %v616 = vunpack.c.h.b16 %v245
        %v617 = vunpack.c.l.b16 %v246
        %v618 = vunpack.c.h.b16 %v246
        %v619 = vunpack.c.l.b16 %v247
        %v620 = vunpack.c.h.b16 %v247
        %v621 = vunpack.c.l.b16 %v248
        %v622 = vunpack.c.h.b16 %v248
        %v623 = vunpack.c.l.b16 %v249
        %v624 = vunpack.c.h.b16 %v249
        %v625 = vunpack.c.l.b16 %v250
        %v626 = vunpack.c.h.b16 %v250
        %v627 = vunpack.c.l.b16 %v251
        %v628 = vunpack.c.h.b16 %v251
        %v629 = vunpack.c.l.b16 %v252
        %v630 = vunpack.c.h.b16 %v252
        %v631 = vunpack.c.l.b16 %v253
        %v632 = vunpack.c.h.b16 %v253
        %v633 = vunpack.c.l.b16 %v254
        %v634 = vunpack.c.h.b16 %v254
        %v635 = vunpack.c.l.b16 %v255
        %v636 = vunpack.c.h.b16 %v255
        %v637 = vunpack.c.l.b16 %v256
        %v638 = vunpack.c.h.b16 %v256
        %v639 = vunpack.c.l.b16 %v257
        %v640 = vunpack.c.h.b16 %v257
        %v641 = vunpack.c.l.b16 %v258
        %v642 = vunpack.c.h.b16 %v258
        %v643 = vunpack.c.l.b16 %v259
        %v644 = vunpack.c.h.b16 %v259
        %v645 = vunpack.c.l.b16 %v260
        %v646 = vunpack.c.h.b16 %v260
        %v647 = vunpack.c.l.b16 %v261
        %v648 = vunpack.c.h.b16 %v261
        %v649 = vunpack.c.l.b16 %v262
        %v650 = vunpack.c.h.b16 %v262
        %v651 = vunpack.c.l.b16 %v263
        %v652 = vunpack.c.h.b16 %v263
        %v653 = vunpack.c.l.b16 %v264
        %v654 = vunpack.c.h.b16 %v264
        %v655 = vunpack.c.l.b16 %v265
        %v656 = vunpack.c.h.b16 %v265
        %v657 = vunpack.c.l.b16 %v266
        %v658 = vunpack.c.h.b16 %v266
        %v659 = vunpack.c.l.b16 %v267
        %v660 = vunpack.c.h.b16 %v267
        %v661 = vunpack.c.l.b16 %v268
        %v662 = vunpack.c.h.b16 %v268
        %v663 = vunpack.c.l.b16 %v269
        %v664 = vunpack.c.h.b16 %v269
        %v665 = vunpack.c.l.b16 %v270
        %v666 = vunpack.c.h.b16 %v270
        %v667 = vunpack.c.l.b16 %v271
        %v668 = vunpack.c.h.b16 %v271
        %v669 = vunpack.c.l.b16 %v272
        %v670 = vunpack.c.h.b16 %v272
        %v671 = vunpack.c.l.b16 %v273
        %v672 = vunpack.c.h.b16 %v273
        %v673 = vunpack.c.l.b16 %v274
        %v674 = vunpack.c.h.b16 %v274
        %v675 = vunpack.c.l.b16 %v275
        %v676 = vunpack.c.h.b16 %v275
        %v677 = vunpack.c.l.b16 %v276
        %v678 = vunpack.c.h.b16 %v276
        %v679 = vunpack.c.l.b16 %v277
        %v680 = vunpack.c.h.b16 %v277
        %v681 = vunpack.c.l.b16 %v278
        %v682 = vunpack.c.h.b16 %v278
        %v683 = vunpack.c.l.b16 %v279
        %v684 = vunpack.c.h.b16 %v279
        %v685 = vunpack.c.l.b16 %v280
        %v686 = vunpack.c.h.b16 %v280
        %v687 = vunpack.c.l.b16 %v281
        %v688 = vunpack.c.h.b16 %v281
        %v689 = vunpack.c.l.b16 %v282
        %v690 = vunpack.c.h.b16 %v282
        %v691 = vunpack.c.l.b16 %v283
        %v692 = vunpack.c.h.b16 %v283
        %v693 = vunpack.c.l.b16 %v284
        %v694 = vunpack.c.h.b16 %v284
        %v695 = vunpack.c.l.b16 %v285
        %v696 = vunpack.c.h.b16 %v285
        %v697 = vunpack.c.l.b16 %v286
        %v698 = vunpack.c.h.b16 %v286
        %v699 = vunpack.c.l.b16 %v287
        %v700 = vunpack.c.h.b16 %v287
        %v701 = vunpack.c.l.b16 %v288
        %v702 = vunpack.c.h.b16 %v288
        %v703 = vunpack.c.l.b16 %v289
        %v704 = vunpack.c.h.b16 %v289
        %v705 = vunpack.c.l.b16 %v290
        %v706 = vunpack.c.h.b16 %v290
        %v707 = vunpack.c.l.b16 %v291
        %v708 = vunpack.c.h.b16 %v291
        %v709 = vunpack.c.l.b16 %v292
        %v710 = vunpack.c.h.b16 %v292
        %v711 = vunpack.c.l.b16 %v293
        %v712 = vunpack.c.h.b16 %v293
        %v713 = vunpack.c.l.b16 %v294
        %v714 = vunpack.c.h.b16 %v294
        %v715 = vunpack.c.l.b16 %v295
        %v716 = vunpack.c.h.b16 %v295
        %v717 = vunpack.c.l.b16 %v296
        %v718 = vunpack.c.h.b16 %v296
        %v719 = vunpack.c.l.b16 %v297
        %v720 = vunpack.c.h.b16 %v297
        %v721 = vunpack.c.l.b16 %v298
        %v722 = vunpack.c.h.b16 %v298
        %v723 = vunpack.c.l.b16 %v299
        %v724 = vunpack.c.h.b16 %v299
        %v725 = vunpack.c.l.b16 %v300
        %v726 = vunpack.c.h.b16 %v300
        %v727 = vunpack.c.l.b16 %v301
        %v728 = vunpack.c.h.b16 %v301
        %v729 = vunpack.c.l.b16 %v302
        %v730 = vunpack.c.h.b16 %v302
        %v731 = vunpack.c.l.b16 %v303
        %v732 = vunpack.c.h.b16 %v303
        %v733 = vunpack.c.l.b16 %v304
        %v734 = vunpack.c.h.b16 %v304
        %v735 = vunpack.c.l.b16 %v305
        %v736 = vunpack.c.h.b16 %v305
        %v737 = vunpack.c.l.b16 %v306
        %v738 = vunpack.c.h.b16 %v306
        %v739 = vpack.c.b16 %v485, %v483
        %v740 = vpack.c.b16 %v486, %v484
        %v741 = vpack.c.b16 %v489, %v487
        %v742 = vpack.c.b16 %v490, %v488
        %v743 = vpack.c.b16 %v493, %v491
        %v744 = vpack.c.b16 %v494, %v492
        %v745 = vpack.c.b16 %v497, %v495
        %v746 = vpack.c.b16 %v498, %v496
        %v747 = vpack.c.b16 %v501, %v499
        %v748 = vpack.c.b16 %v502, %v500
        %v749 = vpack.c.b16 %v505, %v503
        %v750 = vpack.c.b16 %v506, %v504
        %v751 = vpack.c.b16 %v509, %v507
        %v752 = vpack.c.b16 %v510, %v508
        %v753 = vpack.c.b16 %v513, %v511
        %v754 = vpack.c.b16 %v514, %v512
        %v755 = vpack.c.b16 %v517, %v515
        %v756 = vpack.c.b16 %v518, %v516
        %v757 = vpack.c.b16 %v521, %v519
        %v758 = vpack.c.b16 %v522, %v520
        %v759 = vpack.c.b16 %v525, %v523
        %v760 = vpack.c.b16 %v526, %v524
        %v761 = vpack.c.b16 %v529, %v527
        %v762 = vpack.c.b16 %v530, %v528
        %v763 = vpack.c.b16 %v533, %v531
        %v764 = vpack.c.b16 %v534, %v532
        %v765 = vpack.c.b16 %v537, %v535
        %v766 = vpack.c.b16 %v538, %v536
        %v767 = vpack.c.b16 %v541, %v539
        %v768 = vpack.c.b16 %v542, %v540
        %v769 = vpack.c.b16 %v545, %v543
        %v770 = vpack.c.b16 %v546, %v544
        %v771 = vpack.c.b16 %v549, %v547
        %v772 = vpack.c.b16 %v550, %v548
        %v773 = vpack.c.b16 %v553, %v551
        %v774 = vpack.c.b16 %v554, %v552
        %v775 = vpack.c.b16 %v557, %v555
        %v776 = vpack.c.b16 %v558, %v556
        %v777 = vpack.c.b16 %v561, %v559
        %v778 = vpack.c.b16 %v562, %v560
        %v779 = vpack.c.b16 %v565, %v563
        %v780 = vpack.c.b16 %v566, %v564
        %v781 = vpack.c.b16 %v569, %v567
        %v782 = vpack.c.b16 %v570, %v568
        %v783 = vpack.c.b16 %v573, %v571
        %v784 = vpack.c.b16 %v574, %v572
        %v785 = vpack.c.b16 %v577, %v575
        %v786 = vpack.c.b16 %v578, %v576
        %v787 = vpack.c.b16 %v581, %v579
        %v788 = vpack.c.b16 %v582, %v580
        %v789 = vpack.c.b16 %v585, %v583
        %v790 = vpack.c.b16 %v586, %v584
        %v791 = vpack.c.b16 %v589, %v587
        %v792 = vpack.c.b16 %v590, %v588
        %v793 = vpack.c.b16 %v593, %v591
        %v794 = vpack.c.b16 %v594, %v592
        %v795 = vpack.c.b16 %v597, %v595
        %v796 = vpack.c.b16 %v598, %v596
        %v797 = vpack.c.b16 %v601, %v599
        %v798 = vpack.c.b16 %v602, %v600
        %v799 = vpack.c.b16 %v605, %v603
        %v800 = vpack.c.b16 %v606, %v604
        %v801 = vpack.c.b16 %v609, %v607
        %v802 = vpack.c.b16 %v610, %v608
        %v803 = vpack.c.b16 %v613, %v611
        %v804 = vpack.c.b16 %v614, %v612
        %v805 = vpack.c.b16 %v617, %v615
        %v806 = vpack.c.b16 %v618, %v616
        %v807 = vpack.c.b16 %v621, %v619
        %v808 = vpack.c.b16 %v622, %v620
        %v809 = vpack.c.b16 %v625, %v623
        %v810 = vpack.c.b16 %v626, %v624
        %v811 = vpack.c.b16 %v629, %v627
        %v812 = vpack.c.b16 %v630, %v628
        %v813 = vpack.c.b16 %v633, %v631
        %v814 = vpack.c.b16 %v634, %v632
        %v815 = vpack.c.b16 %v637, %v635
        %v816 = vpack.c.b16 %v638, %v636
        %v817 = vpack.c.b16 %v641, %v639
        %v818 = vpack.c.b16 %v642, %v640
        %v819 = vpack.c.b16 %v645, %v643
        %v820 = vpack.c.b16 %v646, %v644
        %v821 = vpack.c.b16 %v649, %v647
        %v822 = vpack.c.b16 %v650, %v648
        %v823 = vpack.c.b16 %v653, %v651
        %v824 = vpack.c.b16 %v654, %v652
        %v825 = vpack.c.b16 %v657, %v655
        %v826 = vpack.c.b16 %v658, %v656
        %v827 = vpack.c.b16 %v661, %v659
        %v828 = vpack.c.b16 %v662, %v660
        %v829 = vpack.c.b16 %v665, %v663
        %v830 = vpack.c.b16 %v666, %v664
        %v831 = vpack.c.b16 %v669, %v667
        %v832 = vpack.c.b16 %v670, %v668
        %v833 = vpack.c.b16 %v673, %v671
        %v834 = vpack.c.b16 %v674, %v672
        %v835 = vpack.c.b16 %v677, %v675
        %v836 = vpack.c.b16 %v678, %v676
        %v837 = vpack.c.b16 %v681, %v679
        %v838 = vpack.c.b16 %v682, %v680
        %v839 = vpack.c.b16 %v685, %v683
        %v840 = vpack.c.b16 %v686, %v684
        %v841 = vpack.c.b16 %v689, %v687
        %v842 = vpack.c.b16 %v690, %v688
        %v843 = vpack.c.b16 %v693, %v691
        %v844 = vpack.c.b16 %v694, %v692
        %v845 = vpack.c.b16 %v697, %v695
        %v846 = vpack.c.b16 %v698, %v696
        %v847 = vpack.c.b16 %v701, %v699
        %v848 = vpack.c.b16 %v702, %v700
        %v849 = vpack.c.b16 %v705, %v703
        %v850 = vpack.c.b16 %v706, %v704
        %v851 = vpack.c.b16 %v709, %v707
        %v852 = vpack.c.b16 %v710, %v708
        %v853 = vpack.c.b16 %v713, %v711
        %v854 = vpack.c.b16 %v714, %v712
        %v855 = vpack.c.b16 %v717, %v715
        %v856 = vpack.c.b16 %v718, %v716
        %v857 = vpack.c.b16 %v721, %v719
        %v858 = vpack.c.b16 %v722, %v720
        %v859 = vpack.c.b16 %v725, %v723
        %v860 = vpack.c.b16 %v726, %v724
        %v861 = vpack.c.b16 %v729, %v727
        %v862 = vpack.c.b16 %v730, %v728
        %v863 = vpack.c.b16 %v733, %v731
        %v864 = vpack.c.b16 %v734, %v732
        %v865 = vpack.c.b16 %v737, %v735
        %v866 = vpack.c.b16 %v738, %v736
        %995 = vmatpush.bf16.msra.mxu0 %v753
        %996 = vmatpush.bf16.msra.mxu0 %v751
        %997 = vmatpush.bf16.msra.mxu0 %v749
        %998 = vmatpush.bf16.msra.mxu0 %v747
        %999 = vmatpush.bf16.msra.mxu0 %v745
        %1000 = vmatpush.bf16.msra.mxu0 %v743
        %1001 = vmatpush.bf16.msra.mxu0 %v741
        %1002 = vmatpush.bf16.msra.mxu0 %v739
        %1003 = vmatmul.bf16.gmra.mxu0 %v339
        %v1004 = vpop.f32.mrf.mxu0
        %v1005 = vadd.f32 0.0, %v1004
        %v1006 = vpop.f32.mrf.mxu0
        %v1007 = vadd.f32 0.0, %v1006
        %1008 = vdwg.mxu0
        %1009 = vmatpush.bf16.msra.mxu0 %v769
        %1010 = vmatpush.bf16.msra.mxu0 %v767
        %1011 = vmatpush.bf16.msra.mxu0 %v765
        %1012 = vmatpush.bf16.msra.mxu0 %v763
        %1013 = vmatpush.bf16.msra.mxu0 %v761
        %1014 = vmatpush.bf16.msra.mxu0 %v759
        %1015 = vmatpush.bf16.msra.mxu0 %v757
        %1016 = vmatpush.bf16.msra.mxu0 %v755
        %1017 = vmatmul.bf16.gmra.mxu0 %v340
        %v1018 = vpop.f32.mrf.mxu0
        %v1019 = vadd.f32 %v1005, %v1018
        %v1020 = vpop.f32.mrf.mxu0
        %v1021 = vadd.f32 %v1007, %v1020
        %1022 = vdwg.mxu0
        %1023 = vmatpush.bf16.msra.mxu0 %v785
        %1024 = vmatpush.bf16.msra.mxu0 %v783
        %1025 = vmatpush.bf16.msra.mxu0 %v781
        %1026 = vmatpush.bf16.msra.mxu0 %v779
        %1027 = vmatpush.bf16.msra.mxu0 %v777
        %1028 = vmatpush.bf16.msra.mxu0 %v775
        %1029 = vmatpush.bf16.msra.mxu0 %v773
        %1030 = vmatpush.bf16.msra.mxu0 %v771
        %1031 = vmatmul.bf16.gmra.mxu0 %v341
        %v1032 = vpop.f32.mrf.mxu0
        %v1033 = vadd.f32 %v1019, %v1032
        %v1034 = vpop.f32.mrf.mxu0
        %v1035 = vadd.f32 %v1021, %v1034
        %1036 = vdwg.mxu0
        %1037 = vmatpush.bf16.msra.mxu0 %v801
        %1038 = vmatpush.bf16.msra.mxu0 %v799
        %1039 = vmatpush.bf16.msra.mxu0 %v797
        %1040 = vmatpush.bf16.msra.mxu0 %v795
        %1041 = vmatpush.bf16.msra.mxu0 %v793
        %1042 = vmatpush.bf16.msra.mxu0 %v791
        %1043 = vmatpush.bf16.msra.mxu0 %v789
        %1044 = vmatpush.bf16.msra.mxu0 %v787
        %1045 = vmatmul.bf16.gmra.mxu0 %v342
        %v1046 = vpop.f32.mrf.mxu0
        %v1047 = vadd.f32 %v1033, %v1046
        %v1048 = vpop.f32.mrf.mxu0
        %v1049 = vadd.f32 %v1035, %v1048
        %1050 = vdwg.mxu0
        %1051 = vmatpush.bf16.msra.mxu0 %v817
        %1052 = vmatpush.bf16.msra.mxu0 %v815
        %1053 = vmatpush.bf16.msra.mxu0 %v813
        %1054 = vmatpush.bf16.msra.mxu0 %v811
        %1055 = vmatpush.bf16.msra.mxu0 %v809
        %1056 = vmatpush.bf16.msra.mxu0 %v807
        %1057 = vmatpush.bf16.msra.mxu0 %v805
        %1058 = vmatpush.bf16.msra.mxu0 %v803
        %1059 = vmatmul.bf16.gmra.mxu0 %v343
        %v1060 = vpop.f32.mrf.mxu0
        %v1061 = vadd.f32 %v1047, %v1060
        %v1062 = vpop.f32.mrf.mxu0
        %v1063 = vadd.f32 %v1049, %v1062
        %1064 = vdwg.mxu0
        %1065 = vmatpush.bf16.msra.mxu0 %v833
        %1066 = vmatpush.bf16.msra.mxu0 %v831
        %1067 = vmatpush.bf16.msra.mxu0 %v829
        %1068 = vmatpush.bf16.msra.mxu0 %v827
        %1069 = vmatpush.bf16.msra.mxu0 %v825
        %1070 = vmatpush.bf16.msra.mxu0 %v823
        %1071 = vmatpush.bf16.msra.mxu0 %v821
        %1072 = vmatpush.bf16.msra.mxu0 %v819
        %1073 = vmatmul.bf16.gmra.mxu0 %v344
        %v1074 = vpop.f32.mrf.mxu0
        %v1075 = vadd.f32 %v1061, %v1074
        %v1076 = vpop.f32.mrf.mxu0
        %v1077 = vadd.f32 %v1063, %v1076
        %1078 = vdwg.mxu0
        %1079 = vmatpush.bf16.msra.mxu0 %v849
        %1080 = vmatpush.bf16.msra.mxu0 %v847
        %1081 = vmatpush.bf16.msra.mxu0 %v845
        %1082 = vmatpush.bf16.msra.mxu0 %v843
        %1083 = vmatpush.bf16.msra.mxu0 %v841
        %1084 = vmatpush.bf16.msra.mxu0 %v839
        %1085 = vmatpush.bf16.msra.mxu0 %v837
        %1086 = vmatpush.bf16.msra.mxu0 %v835
        %1087 = vmatmul.bf16.gmra.mxu0 %v345
        %v1088 = vpop.f32.mrf.mxu0
        %v1089 = vadd.f32 %v1075, %v1088
        %v1090 = vpop.f32.mrf.mxu0
        %v1091 = vadd.f32 %v1077, %v1090
        %1092 = vdwg.mxu0
        %1093 = vmatpush.bf16.msra.mxu0 %v865
        %1094 = vmatpush.bf16.msra.mxu0 %v863
        %1095 = vmatpush.bf16.msra.mxu0 %v861
        %1096 = vmatpush.bf16.msra.mxu0 %v859
        %1097 = vmatpush.bf16.msra.mxu0 %v857
        %1098 = vmatpush.bf16.msra.mxu0 %v855
        %1099 = vmatpush.bf16.msra.mxu0 %v853
        %1100 = vmatpush.bf16.msra.mxu0 %v851
        %1101 = vmatmul.bf16.gmra.mxu0 %v346
        %v1102 = vpop.f32.mrf.mxu0
        %v1103 = vadd.f32 %v1089, %v1102
        %v1104 = vpop.f32.mrf.mxu0
        %v1105 = vadd.f32 %v1091, %v1104
        %1106 = vdwg.mxu0
        %1107 = vmatpush.bf16.msra.mxu0 %v754
        %1108 = vmatpush.bf16.msra.mxu0 %v752
        %1109 = vmatpush.bf16.msra.mxu0 %v750
        %1110 = vmatpush.bf16.msra.mxu0 %v748
        %1111 = vmatpush.bf16.msra.mxu0 %v746
        %1112 = vmatpush.bf16.msra.mxu0 %v744
        %1113 = vmatpush.bf16.msra.mxu0 %v742
        %1114 = vmatpush.bf16.msra.mxu0 %v740
        %1115 = vmatmul.bf16.gmra.mxu0 %v339
        %v1116 = vpop.f32.mrf.mxu0
        %v1117 = vadd.f32 0.0, %v1116
        %v1118 = vpop.f32.mrf.mxu0
        %v1119 = vadd.f32 0.0, %v1118
        %1120 = vdwg.mxu0
        %1121 = vmatpush.bf16.msra.mxu0 %v770
        %1122 = vmatpush.bf16.msra.mxu0 %v768
        %1123 = vmatpush.bf16.msra.mxu0 %v766
        %1124 = vmatpush.bf16.msra.mxu0 %v764
        %1125 = vmatpush.bf16.msra.mxu0 %v762
        %1126 = vmatpush.bf16.msra.mxu0 %v760
        %1127 = vmatpush.bf16.msra.mxu0 %v758
        %1128 = vmatpush.bf16.msra.mxu0 %v756
        %1129 = vmatmul.bf16.gmra.mxu0 %v340
        %v1130 = vpop.f32.mrf.mxu0
        %v1131 = vadd.f32 %v1117, %v1130
        %v1132 = vpop.f32.mrf.mxu0
        %v1133 = vadd.f32 %v1119, %v1132
        %1134 = vdwg.mxu0
        %1135 = vmatpush.bf16.msra.mxu0 %v786
        %1136 = vmatpush.bf16.msra.mxu0 %v784
        %1137 = vmatpush.bf16.msra.mxu0 %v782
        %1138 = vmatpush.bf16.msra.mxu0 %v780
        %1139 = vmatpush.bf16.msra.mxu0 %v778
        %1140 = vmatpush.bf16.msra.mxu0 %v776
        %1141 = vmatpush.bf16.msra.mxu0 %v774
        %1142 = vmatpush.bf16.msra.mxu0 %v772
        %1143 = vmatmul.bf16.gmra.mxu0 %v341
        %v1144 = vpop.f32.mrf.mxu0
        %v1145 = vadd.f32 %v1131, %v1144
        %v1146 = vpop.f32.mrf.mxu0
        %v1147 = vadd.f32 %v1133, %v1146
        %1148 = vdwg.mxu0
        %1149 = vmatpush.bf16.msra.mxu0 %v802
        %1150 = vmatpush.bf16.msra.mxu0 %v800
        %1151 = vmatpush.bf16.msra.mxu0 %v798
        %1152 = vmatpush.bf16.msra.mxu0 %v796
        %1153 = vmatpush.bf16.msra.mxu0 %v794
        %1154 = vmatpush.bf16.msra.mxu0 %v792
        %1155 = vmatpush.bf16.msra.mxu0 %v790
        %1156 = vmatpush.bf16.msra.mxu0 %v788
        %1157 = vmatmul.bf16.gmra.mxu0 %v342
        %v1158 = vpop.f32.mrf.mxu0
        %v1159 = vadd.f32 %v1145, %v1158
        %v1160 = vpop.f32.mrf.mxu0
        %v1161 = vadd.f32 %v1147, %v1160
        %1162 = vdwg.mxu0
        %1163 = vmatpush.bf16.msra.mxu0 %v818
        %1164 = vmatpush.bf16.msra.mxu0 %v816
        %1165 = vmatpush.bf16.msra.mxu0 %v814
        %1166 = vmatpush.bf16.msra.mxu0 %v812
        %1167 = vmatpush.bf16.msra.mxu0 %v810
        %1168 = vmatpush.bf16.msra.mxu0 %v808
        %1169 = vmatpush.bf16.msra.mxu0 %v806
        %1170 = vmatpush.bf16.msra.mxu0 %v804
        %1171 = vmatmul.bf16.gmra.mxu0 %v343
        %v1172 = vpop.f32.mrf.mxu0
        %v1173 = vadd.f32 %v1159, %v1172
        %v1174 = vpop.f32.mrf.mxu0
        %v1175 = vadd.f32 %v1161, %v1174
        %1176 = vdwg.mxu0
        %1177 = vmatpush.bf16.msra.mxu0 %v834
        %1178 = vmatpush.bf16.msra.mxu0 %v832
        %1179 = vmatpush.bf16.msra.mxu0 %v830
        %1180 = vmatpush.bf16.msra.mxu0 %v828
        %1181 = vmatpush.bf16.msra.mxu0 %v826
        %1182 = vmatpush.bf16.msra.mxu0 %v824
        %1183 = vmatpush.bf16.msra.mxu0 %v822
        %1184 = vmatpush.bf16.msra.mxu0 %v820
        %1185 = vmatmul.bf16.gmra.mxu0 %v344
        %v1186 = vpop.f32.mrf.mxu0
        %v1187 = vadd.f32 %v1173, %v1186
        %v1188 = vpop.f32.mrf.mxu0
        %v1189 = vadd.f32 %v1175, %v1188
        %1190 = vdwg.mxu0
        %1191 = vmatpush.bf16.msra.mxu0 %v850
        %1192 = vmatpush.bf16.msra.mxu0 %v848
        %1193 = vmatpush.bf16.msra.mxu0 %v846
        %1194 = vmatpush.bf16.msra.mxu0 %v844
        %1195 = vmatpush.bf16.msra.mxu0 %v842
        %1196 = vmatpush.bf16.msra.mxu0 %v840
        %1197 = vmatpush.bf16.msra.mxu0 %v838
        %1198 = vmatpush.bf16.msra.mxu0 %v836
        %1199 = vmatmul.bf16.gmra.mxu0 %v345
        %v1200 = vpop.f32.mrf.mxu0
        %v1201 = vadd.f32 %v1187, %v1200
        %v1202 = vpop.f32.mrf.mxu0
        %v1203 = vadd.f32 %v1189, %v1202
        %1204 = vdwg.mxu0
        %1205 = vmatpush.bf16.msra.mxu0 %v866
        %1206 = vmatpush.bf16.msra.mxu0 %v864
        %1207 = vmatpush.bf16.msra.mxu0 %v862
        %1208 = vmatpush.bf16.msra.mxu0 %v860
        %1209 = vmatpush.bf16.msra.mxu0 %v858
        %1210 = vmatpush.bf16.msra.mxu0 %v856
        %1211 = vmatpush.bf16.msra.mxu0 %v854
        %1212 = vmatpush.bf16.msra.mxu0 %v852
        %1213 = vmatmul.bf16.gmra.mxu0 %v346
        %v1214 = vpop.f32.mrf.mxu0
        %v1215 = vadd.f32 %v1201, %v1214
        %v1216 = vpop.f32.mrf.mxu0
        %v1217 = vadd.f32 %v1203, %v1216
        %1218 = vdwg.mxu0
        %vm1219 = vcmask 556032
        %v1220 = vsel %vm1219, %v1215, 0.0
        %v1221 = vadd.f32 %v1103, %v1220
        %1222 = vadd.xlane.f32.xlu0 %v1221
        %v1223 = vpop.xlane.xlu0 %1222
        %vm1224 = vcmask 1042432
        %v1225 = vsel %vm1224, %v1105, 0.0
        %vm1226 = vcmask 550912
        %v1227 = vsel %vm1226, %v1217, 0.0
        %v1228 = vadd.f32 %v1225, %v1227
        %1229 = vadd.xlane.f32.xlu0 %v1228
        %v1230 = vpop.xlane.xlu0 %1229
        %v1231 = vmul.f32 %v1223, 0.0051020407
        %v1232 = vmul.f32 %v1230, 0.0051020407
        %v1233 = vld [vmem:[%s2] sm:$0xff]
        %v1234 = vld [vmem:[%s2 + $0x8] sm:$0xff]
        %v1235 = vperm.slane %v1103, 0
        %v1236 = vperm.slane %v1215, 0
        %v1237 = vadd.f32 %v1235, %v1233
        %v1238 = vadd.f32 %v1236, %v1234
        %v1239 = vsel %vm1219, %v1238, -inf
        %v1240 = vmax.f32 %v1237, %v1239
        %1241 = vmax.xlane.f32.xlu0 %v1240
        %v1242 = vpop.xlane.xlu0 %1241
        %v1243 = vxor.u32 %v1242, 2147483648
        %v1244 = vmul.f32 %v1243, 1.442695
        %v1245 = vpow.pop %v1244
        %v1246 = vadd.f32 %v1245, 1.0
        %v1247 = vrcp.pop %v1246
        %v1248 = vmul.f32 %v1246, %v1247
        %v1249 = vsub.f32 1.0, %v1248
        %v1250 = vmul.f32 %v1247, %v1249
        %v1251 = vadd.f32 %v1247, %v1250
        %vm1252 = vweird.f32 %v1246
        %vm1253 = vweird.f32 %v1247
        %vm1254 = vmor %vm1252, %vm1253
        %v1255 = vsel %vm1254, %v1247, %v1251
        %v1256 = vand.u32 2147483647, %v1246
        %vm1257 = vcmp.eq.f32.partialorder %v1256, 8.507059e+37
        %v1258 = vand.u32 %v1246, 2147483648
        %v1259 = vor.u32 1.1754944e-38, %v1258
        %v1260 = vsel %vm1257, %v1259, %v1255
        %v1261 = vmul.f32 1.0, %v1260
        %v1262 = vsel %vm175, %v1231, 0.0
        %v1263 = vsel %vm176, %v1232, 0.0
        %v1264 = vsel %vm1224, %v1263, 0.0
        %v1265 = vadd.f32 %v1262, %v1264
        %v1266 = vrot.slane %v1265, 4
        %v1267 = vadd.f32 %v1265, %v1266
        %v1268 = vrot.slane %v1267, 2
        %v1269 = vadd.f32 %v1267, %v1268
        %v1270 = vrot.slane %v1269, 1
        %v1271 = vadd.f32 %v1269, %v1270
        %v1272 = vsel %vm178, %v1261, 0.0
        %v1273 = vrot.slane %v1272, 4
        %v1274 = vadd.f32 %v1272, %v1273
        %v1275 = vrot.slane %v1274, 2
        %v1276 = vadd.f32 %v1274, %v1275
        %v1277 = vrot.slane %v1276, 1
        %v1278 = vadd.f32 %v1276, %v1277
        %v1279 = vadd.f32 %v1271, %v1278
        %1280 = vst [vmem:[%s162] sm:$0x1] %v1279
        %s1281 = sand.u32 %s93, 1
        %s1282 = scalar_lea.sflag [#allocation3], %s1281
        %s1283 = sand.u32 %s93, 1
        %s1284 = scalar_lea.vmem [#allocation2], %s1283
        // Predicated region
        $region33: #{tpu_custom_call.1} parent=31 // pred_check
          %p1285 = pneg %p103
        $region34: #{tpu_custom_call.1} parent=31 // pred_check_branch
          %1287 = sbr.rel (%p1285) target = $region36
        $region35: #{tpu_custom_call.1} parent=31 // pred_region
          %1289 = vsyncadd %s1282, 0
          %s1290 = scalar_lea.hbm %s3, %s17
          %s1292 = sshll.u32 %s1284, 4
          %s1293 = int_to_ptr.vmem [resolvable:$true] %s1292
          %s1294 = sshll.u32 %s1290, 4
          %s1295 = int_to_ptr.hbm [resolvable:$true] %s1294
          %1297 = dma.vmem_to_hbm [thread:$0]  %s1293, 16, %s1295, %s1282
        $region36: #{tpu_custom_call.1} parent=31 // pred_fallthru
          _
      $region32: #{tpu_custom_call.1} parent=5 // pred_fallthru
        _
      %p1298 = scmp.le.s32.totalorder 2, %s12
      // Predicated region
      $region37: #{tpu_custom_call.1} parent=5 // pred_check
        %p1299 = pneg %p1298
      $region38: #{tpu_custom_call.1} parent=5 // pred_check_branch
        %1301 = sbr.rel (%p1299) target = $region40
      $region39: #{tpu_custom_call.1} parent=5 // pred_region
        %s1302 = ssub.s32 %s12, 2
        // Predicated region
        $region41: #{tpu_custom_call.1} parent=39 // pred_check
          %p1303 = pneg %p109
        $region42: #{tpu_custom_call.1} parent=39 // pred_check_branch
          %1305 = sbr.rel (%p1303) target = $region44
        $region43: #{tpu_custom_call.1} parent=39 // pred_region
          %s1306 = sand.u32 %s94, 1
          %s1307 = scalar_lea.sflag [#allocation3], %s1306
          %s1308 = sand.u32 %s94, 1
          %s1309 = scalar_lea.vmem [#allocation2], %s1308
          %1311 = dma.done %s1307, 16
        $region44: #{tpu_custom_call.1} parent=39 // pred_fallthru
          _
      $region40: #{tpu_custom_call.1} parent=5 // pred_fallthru
        _
    $region6: #{tpu_custom_call.1} parent=1 // loop_footer
      %s16 = sadd.s32 1, %s12
    $region7: #{tpu_custom_call.1} parent=1 // loop_footer_branch
      %11 = sbr.rel target = $region3
    $region8: #{tpu_custom_call.1} parent=1 // loop_exit
      _
    %1312 = vsyncpa [#allocation3], 1
    %s1313 = scalar_lea.sflag [#allocation3], 1
    %1314 = vsyncpa %s1313, 1

</llo_original>
